<compile_context>
chip_gen: v6e
topology: v6e:2x2x1
jax: 0.10.0
libtpu: 0.0.40
codegen_flags: <defaults>
</compile_context>

<pallas_src>
import functools

import jax
import jax.numpy as jnp
import numpy as np
from jax.experimental import pallas as pl
from jax.experimental.pallas import tpu as pltpu

_LANE = 128
_SUBLANE = 8


def _round_up(x, m):
    return ((x + m - 1) // m) * m


def _cdiv(a, b):
    return -(-a // b)


def _default_batch_tile(B, max_tile=128):
    """Pick a batch tile that (a) caps at 128 rows (one MXU M-pass, bounded spill),
    (b) minimizes batch padding, (c) yields >=2 grid tiles when B allows so v7x's
    second TensorCore is fed via the 'parallel' axis."""
    n_tiles = max(1, _cdiv(B, max_tile))
    if n_tiles == 1 and B >= 2 * _SUBLANE:
        n_tiles = 2
    return max(_SUBLANE, _round_up(_cdiv(B, n_tiles), _SUBLANE))


def _resident_spec(shape):
    """Full-array block, constant index_map (VMEM-resident across grid steps),
    single-buffered since the block never changes."""
    index_map = lambda i: (0,) * len(shape)
    try:
        return pl.BlockSpec(shape, index_map, pipeline_mode=pl.Buffered(1))
    except TypeError:
        # TODO(synk): JAX build without BlockSpec.pipeline_mode -> default buffering.
        return pl.BlockSpec(shape, index_map)


def _fused_mlp_kernel(*refs, n_layer):
    """Fused (Linear -> ReLU) x (n_layer + 1) -> Linear on one batch tile.

    All weights/biases are full-array VMEM blocks; intermediates live in vregs.
    """
    if n_layer > 0:
        x_ref, w0_ref, b0_ref, wh_ref, bh_ref, wo_ref, bo_ref, o_ref = refs
    else:
        x_ref, w0_ref, b0_ref, wo_ref, bo_ref, o_ref = refs
        wh_ref = bh_ref = None

    cdt = w0_ref.dtype  # compute (MXU input) dtype, e.g. bf16

    # First layer: (TB, Din) @ (Din, H) + b, ReLU.  Accumulate in f32.
    h = jnp.dot(x_ref[...], w0_ref[...], preferred_element_type=jnp.float32)
    h = jnp.maximum(h + b0_ref[...], 0.0)

    # Hidden layers: static unroll (n_layer is small; weights already in VMEM).
    for i in range(n_layer):
        h = jnp.dot(h.astype(cdt), wh_ref[i], preferred_element_type=jnp.float32)
        h = jnp.maximum(h + bh_ref[i], 0.0)

    # Output head (no activation).
    y = jnp.dot(h.astype(cdt), wo_ref[...], preferred_element_type=jnp.float32)
    o_ref[...] = (y + bo_ref[...]).astype(o_ref.dtype)


def prepare_params(params, out_params, compute_dtype=jnp.bfloat16):
    """One-time padding/stacking of weights (lane dims -> multiples of 128).

    Returns (padded_dict, meta_dict).  Weights are cast to `compute_dtype`
    (bf16 for the MXU); biases stay f32.  Zero padding is exact for this net.
    """
    (w0, b0) = params[0]
    hidden = params[1:]
    n_layer = len(hidden)
    n_in, n_hidden = w0.shape
    n_out = out_params[0].shape[1]

    din_p = _round_up(n_in, _LANE)
    h_p = _round_up(n_hidden, _LANE)
    out_p = _round_up(n_out, _LANE)

    w0p = jnp.pad(w0.astype(compute_dtype),
                  ((0, din_p - n_in), (0, h_p - n_hidden)))
    b0p = jnp.pad(b0.astype(jnp.float32), ((0, 0), (0, h_p - n_hidden)))

    if n_layer > 0:
        wh = jnp.stack([w for (w, _) in hidden]).astype(compute_dtype)
        bh = jnp.stack([b for (_, b) in hidden]).astype(jnp.float32)
        whp = jnp.pad(wh, ((0, 0), (0, h_p - n_hidden), (0, h_p - n_hidden)))
        bhp = jnp.pad(bh, ((0, 0), (0, 0), (0, h_p - n_hidden)))
    else:
        whp, bhp = None, None

    wo, bo = out_params
    wop = jnp.pad(wo.astype(compute_dtype),
                  ((0, h_p - n_hidden), (0, out_p - n_out)))
    bop = jnp.pad(bo.astype(jnp.float32), ((0, 0), (0, out_p - n_out)))

    padded = dict(w0=w0p, b0=b0p, wh=whp, bh=bhp, wo=wop, bo=bop)
    meta = dict(n_in=n_in, n_hidden=n_hidden, n_out=n_out, n_layer=n_layer,
                din_p=din_p, h_p=h_p, out_p=out_p)
    return padded, meta


def fused_mlp(x2d, padded, meta, *, batch_tile=None,
              compute_dtype=jnp.bfloat16, out_dtype=jnp.float32):
    """x2d: (B, n_in) activations; padded/meta from prepare_params()."""
    B = x2d.shape[0]
    n_in, n_out, n_layer = meta["n_in"], meta["n_out"], meta["n_layer"]
    din_p, h_p, out_p = meta["din_p"], meta["h_p"], meta["out_p"]

    if batch_tile is None:
        batch_tile = _default_batch_tile(B)
    b_p = _round_up(B, batch_tile)
    n_tiles = b_p // batch_tile

    # Only the activations are padded per call (weights are pre-padded).
    xp = jnp.pad(x2d.astype(compute_dtype), ((0, b_p - B), (0, din_p - n_in)))

    inputs = [xp, padded["w0"], padded["b0"]]
    in_specs = [
        pl.BlockSpec((batch_tile, din_p), lambda i: (i, 0)),   # batch-tiled
        _resident_spec((din_p, h_p)),
        _resident_spec((1, h_p)),
    ]
    if n_layer > 0:
        inputs += [padded["wh"], padded["bh"]]
        in_specs += [_resident_spec((n_layer, h_p, h_p)),
                     _resident_spec((n_layer, 1, h_p))]
    inputs += [padded["wo"], padded["bo"]]
    in_specs += [_resident_spec((h_p, out_p)), _resident_spec((1, out_p))]

    # VMEM budget: single-buffered weights + double-buffered activation/output
    # tiles, with generous headroom for spills/internal scratch.
    w_itemsize = jnp.dtype(compute_dtype).itemsize
    weight_bytes = ((din_p * h_p + n_layer * h_p * h_p + h_p * out_p) * w_itemsize
                    + ((n_layer + 1) * _SUBLANE * h_p + _SUBLANE * out_p) * 4)
    io_bytes = 2 * (batch_tile * din_p * w_itemsize
                    + batch_tile * out_p * jnp.dtype(out_dtype).itemsize)
    vmem_limit = int(min(112 << 20,
                         max(32 << 20, 2 * (weight_bytes + io_bytes) + (2 << 20))))

    kernel = functools.partial(_fused_mlp_kernel, n_layer=n_layer)
    yp = pl.pallas_call(
        kernel,
        out_shape=jax.ShapeDtypeStruct((b_p, out_p), out_dtype),
        grid_spec=pltpu.PrefetchScalarGridSpec(
            num_scalar_prefetch=0,
            grid=(n_tiles,),
            in_specs=in_specs,
            out_specs=pl.BlockSpec((batch_tile, out_p), lambda i: (i, 0)),
        ),
        compiler_params=pltpu.CompilerParams(
            dimension_semantics=("parallel",),
            vmem_limit_bytes=vmem_limit,
        ),
    )(*inputs)
    return yp[:B, :n_out]


def make_net_forward(meta, *, batch_tile=None, compute_dtype=jnp.bfloat16):
    """Returns a jitted forward(x, padded_params) closing over static metadata."""

    @jax.jit
    def forward(x, padded):
        batch = x.shape[0]
        h = x.reshape(batch, -1)  # x.view(x.size(0), -1)
        return fused_mlp(h, padded, meta, batch_tile=batch_tile,
                         compute_dtype=compute_dtype)

    return forward


def init_params(key, n_in, n_hidden, n_out, n_layer, init_val=1.0):
    """Matches the PyTorch module's custom init:
       first layer ~ N(0, sqrt(init_val / n_in)), hidden ~ N(0, sqrt(init_val / n_hidden)),
       output ~ N(0, sqrt(1 / n_hidden)), all biases = 0.
    Weights stored transposed: (in_features, out_features)."""
    params = []
    keys = jax.random.split(key, n_layer + 2)

    w0 = jax.random.normal(keys[0], (n_in, n_hidden), jnp.float32) * np.sqrt(init_val / n_in)
    params.append((w0, jnp.zeros((1, n_hidden), jnp.float32)))

    for i in range(n_layer):
        wi = jax.random.normal(keys[1 + i], (n_hidden, n_hidden), jnp.float32) * np.sqrt(
            init_val / n_hidden
        )
        params.append((wi, jnp.zeros((1, n_hidden), jnp.float32)))

    wo = jax.random.normal(keys[-1], (n_hidden, n_out), jnp.float32) * np.sqrt(1.0 / n_hidden)
    out_params = (wo, jnp.zeros((1, n_out), jnp.float32))
    return params, out_params


def net_forward_ref(x, params, out_params, compute_dtype=jnp.bfloat16):
    """Pure-JAX reference with the same bf16-matmul / f32-accumulate numerics."""
    h = x.reshape(x.shape[0], -1)
    for (w, b) in params:
        h = jnp.dot(h.astype(compute_dtype), w.astype(compute_dtype),
                    preferred_element_type=jnp.float32) + b
        h = jnp.maximum(h, 0.0)
    wo, bo = out_params
    return jnp.dot(h.astype(compute_dtype), wo.astype(compute_dtype),
                   preferred_element_type=jnp.float32) + bo


if __name__ == "__main__":
    # Small shapes consistent with the module's forward:
    # input (B, C, H, W) = (2, 4, 4, 4) -> flattened n_in = 64
    B, C, H, W = 2, 4, 4, 4
    n_in = C * H * W        # 64
    n_hidden = 32
    n_out = 8
    n_layer = 2             # -> 3 hidden Linear layers total + output Linear

    key = jax.random.PRNGKey(0)
    k_x, k_p = jax.random.split(key)
    x = jax.random.normal(k_x, (B, C, H, W), jnp.float32)

    params, out_params = init_params(k_p, n_in, n_hidden, n_out, n_layer, init_val=1.0)

    # One-time weight padding/stacking (hoisted out of the per-call path).
    padded, meta = prepare_params(params, out_params)
    net_forward = make_net_forward(meta)

    y = jax.block_until_ready(net_forward(x, padded))

    y_ref = net_forward_ref(x, params, out_params)
    np.testing.assert_allclose(np.asarray(y), np.asarray(y_ref), rtol=2e-2, atol=2e-2)
    assert y.shape == (B, n_out)

    print("KERNEL_OK")
</pallas_src>

<mosaic_0001>
module attributes {stable_mosaic.version = 11 : i64} {
  func.func @_fused_mlp_kernel(%arg0: i32, %arg1: memref<8x128xbf16, #tpu.memory_space<vmem>>, %arg2: memref<128x128xbf16, #tpu.memory_space<vmem>>, %arg3: memref<1x128xf32, #tpu.memory_space<vmem>>, %arg4: memref<2x128x128xbf16, #tpu.memory_space<vmem>>, %arg5: memref<2x1x128xf32, #tpu.memory_space<vmem>>, %arg6: memref<128x128xbf16, #tpu.memory_space<vmem>>, %arg7: memref<1x128xf32, #tpu.memory_space<vmem>>, %arg8: memref<8x128xf32, #tpu.memory_space<vmem>>) attributes {dimension_semantics = [#tpu.dimension_semantics<parallel>], iteration_bounds = array<i64: 1>, scalar_prefetch = 0 : i64, scratch_operands = 0 : i64, tpu.core_type = #tpu.core_type<tc>, window_params = [{transform_indices = @transform_0, window_bounds = array<i64: 8, 128>}, {pipeline_mode = #tpu.pipeline_mode<synchronous>, transform_indices = @transform_1, window_bounds = array<i64: 128, 128>}, {pipeline_mode = #tpu.pipeline_mode<synchronous>, transform_indices = @transform_2, window_bounds = array<i64: 1, 128>}, {pipeline_mode = #tpu.pipeline_mode<synchronous>, transform_indices = @transform_3, window_bounds = array<i64: 2, 128, 128>}, {pipeline_mode = #tpu.pipeline_mode<synchronous>, transform_indices = @transform_4, window_bounds = array<i64: 2, 1, 128>}, {pipeline_mode = #tpu.pipeline_mode<synchronous>, transform_indices = @transform_5, window_bounds = array<i64: 128, 128>}, {pipeline_mode = #tpu.pipeline_mode<synchronous>, transform_indices = @transform_6, window_bounds = array<i64: 1, 128>}, {transform_indices = @transform_7, window_bounds = array<i64: 8, 128>}]} {
    %c0 = arith.constant 0 : index
    %c0_0 = arith.constant 0 : index
    %0 = vector.load %arg1[%c0, %c0_0] : memref<8x128xbf16, #tpu.memory_space<vmem>>, vector<8x128xbf16>
    %c0_1 = arith.constant 0 : index
    %c0_2 = arith.constant 0 : index
    %1 = vector.load %arg2[%c0_1, %c0_2] : memref<128x128xbf16, #tpu.memory_space<vmem>>, vector<128x128xbf16>
    %cst = arith.constant dense<0.000000e+00> : vector<8x128xf32>
    %2 = tpu.matmul %0, %1, %cst {dimension_numbers = #tpu.dot_dimension_numbers<[1], [0], [0], [1], [0, 0, 1, 1], [], []>} : vector<8x128xbf16>, vector<128x128xbf16>, vector<8x128xf32> -> vector<8x128xf32>
    %c0_3 = arith.constant 0 : index
    %c0_4 = arith.constant 0 : index
    %3 = vector.load %arg3[%c0_3, %c0_4] : memref<1x128xf32, #tpu.memory_space<vmem>>, vector<1x128xf32>
    %4 = vector.broadcast %3 : vector<1x128xf32> to vector<8x128xf32>
    %5 = arith.addf %2, %4 : vector<8x128xf32>
    %cst_5 = arith.constant 0.000000e+00 : f32
    %6 = vector.broadcast %cst_5 : f32 to vector<8x128xf32>
    %7 = arith.maximumf %5, %6 : vector<8x128xf32>
    %8 = arith.truncf %7 : vector<8x128xf32> to vector<8x128xbf16>
    %c0_6 = arith.constant 0 : index
    %c0_7 = arith.constant 0 : index
    %c0_8 = arith.constant 0 : index
    %9 = vector.load %arg4[%c0_6, %c0_7, %c0_8] : memref<2x128x128xbf16, #tpu.memory_space<vmem>>, vector<1x128x128xbf16>
    %10 = vector.shape_cast %9 : vector<1x128x128xbf16> to vector<128x128xbf16>
    %cst_9 = arith.constant dense<0.000000e+00> : vector<8x128xf32>
    %11 = tpu.matmul %8, %10, %cst_9 {dimension_numbers = #tpu.dot_dimension_numbers<[1], [0], [0], [1], [0, 0, 1, 1], [], []>} : vector<8x128xbf16>, vector<128x128xbf16>, vector<8x128xf32> -> vector<8x128xf32>
    %c0_10 = arith.constant 0 : index
    %c0_11 = arith.constant 0 : index
    %c0_12 = arith.constant 0 : index
    %12 = vector.load %arg5[%c0_10, %c0_11, %c0_12] : memref<2x1x128xf32, #tpu.memory_space<vmem>>, vector<1x1x128xf32>
    %13 = vector.shape_cast %12 : vector<1x1x128xf32> to vector<1x128xf32>
    %14 = vector.broadcast %13 : vector<1x128xf32> to vector<8x128xf32>
    %15 = arith.addf %11, %14 : vector<8x128xf32>
    %cst_13 = arith.constant 0.000000e+00 : f32
    %16 = vector.broadcast %cst_13 : f32 to vector<8x128xf32>
    %17 = arith.maximumf %15, %16 : vector<8x128xf32>
    %18 = arith.truncf %17 : vector<8x128xf32> to vector<8x128xbf16>
    %c1 = arith.constant 1 : index
    %c0_14 = arith.constant 0 : index
    %c0_15 = arith.constant 0 : index
    %19 = vector.load %arg4[%c1, %c0_14, %c0_15] : memref<2x128x128xbf16, #tpu.memory_space<vmem>>, vector<1x128x128xbf16>
    %20 = vector.shape_cast %19 : vector<1x128x128xbf16> to vector<128x128xbf16>
    %cst_16 = arith.constant dense<0.000000e+00> : vector<8x128xf32>
    %21 = tpu.matmul %18, %20, %cst_16 {dimension_numbers = #tpu.dot_dimension_numbers<[1], [0], [0], [1], [0, 0, 1, 1], [], []>} : vector<8x128xbf16>, vector<128x128xbf16>, vector<8x128xf32> -> vector<8x128xf32>
    %c1_17 = arith.constant 1 : index
    %c0_18 = arith.constant 0 : index
    %c0_19 = arith.constant 0 : index
    %22 = vector.load %arg5[%c1_17, %c0_18, %c0_19] : memref<2x1x128xf32, #tpu.memory_space<vmem>>, vector<1x1x128xf32>
    %23 = vector.shape_cast %22 : vector<1x1x128xf32> to vector<1x128xf32>
    %24 = vector.broadcast %23 : vector<1x128xf32> to vector<8x128xf32>
    %25 = arith.addf %21, %24 : vector<8x128xf32>
    %cst_20 = arith.constant 0.000000e+00 : f32
    %26 = vector.broadcast %cst_20 : f32 to vector<8x128xf32>
    %27 = arith.maximumf %25, %26 : vector<8x128xf32>
    %28 = arith.truncf %27 : vector<8x128xf32> to vector<8x128xbf16>
    %c0_21 = arith.constant 0 : index
    %c0_22 = arith.constant 0 : index
    %29 = vector.load %arg6[%c0_21, %c0_22] : memref<128x128xbf16, #tpu.memory_space<vmem>>, vector<128x128xbf16>
    %cst_23 = arith.constant dense<0.000000e+00> : vector<8x128xf32>
    %30 = tpu.matmul %28, %29, %cst_23 {dimension_numbers = #tpu.dot_dimension_numbers<[1], [0], [0], [1], [0, 0, 1, 1], [], []>} : vector<8x128xbf16>, vector<128x128xbf16>, vector<8x128xf32> -> vector<8x128xf32>
    %c0_24 = arith.constant 0 : index
    %c0_25 = arith.constant 0 : index
    %31 = vector.load %arg7[%c0_24, %c0_25] : memref<1x128xf32, #tpu.memory_space<vmem>>, vector<1x128xf32>
    %32 = vector.broadcast %31 : vector<1x128xf32> to vector<8x128xf32>
    %33 = arith.addf %30, %32 : vector<8x128xf32>
    %c0_26 = arith.constant 0 : index
    %c0_27 = arith.constant 0 : index
    %34 = vector.load %arg8[%c0_26, %c0_27] : memref<8x128xf32, #tpu.memory_space<vmem>>, vector<8x128xf32>
    tpu.vector_store %arg8[%c0_26, %c0_27], %33 {strides = array<i32>} : memref<8x128xf32, #tpu.memory_space<vmem>>, vector<8x128xf32>,
    return
  }
  func.func @transform_0(%arg0: i32) -> (i32, i32) {
    %c0_i32 = arith.constant 0 : i32
    %c0_i32_0 = arith.constant 0 : i32
    return %arg0, %c0_i32 : i32, i32
  }
  func.func @transform_1(%arg0: i32) -> (i32, i32) {
    %c0_i32 = arith.constant 0 : i32
    %c0_i32_0 = arith.constant 0 : i32
    %c0_i32_1 = arith.constant 0 : i32
    return %c0_i32, %c0_i32_0 : i32, i32
  }
  func.func @transform_2(%arg0: i32) -> (i32, i32) {
    %c0_i32 = arith.constant 0 : i32
    %c0_i32_0 = arith.constant 0 : i32
    %c0_i32_1 = arith.constant 0 : i32
    return %c0_i32, %c0_i32_0 : i32, i32
  }
  func.func @transform_3(%arg0: i32) -> (i32, i32, i32) {
    %c0_i32 = arith.constant 0 : i32
    %c0_i32_0 = arith.constant 0 : i32
    %c0_i32_1 = arith.constant 0 : i32
    %c0_i32_2 = arith.constant 0 : i32
    return %c0_i32, %c0_i32_0, %c0_i32_1 : i32, i32, i32
  }
  func.func @transform_4(%arg0: i32) -> (i32, i32, i32) {
    %c0_i32 = arith.constant 0 : i32
    %c0_i32_0 = arith.constant 0 : i32
    %c0_i32_1 = arith.constant 0 : i32
    %c0_i32_2 = arith.constant 0 : i32
    return %c0_i32, %c0_i32_0, %c0_i32_1 : i32, i32, i32
  }
  func.func @transform_5(%arg0: i32) -> (i32, i32) {
    %c0_i32 = arith.constant 0 : i32
    %c0_i32_0 = arith.constant 0 : i32
    %c0_i32_1 = arith.constant 0 : i32
    return %c0_i32, %c0_i32_0 : i32, i32
  }
  func.func @transform_6(%arg0: i32) -> (i32, i32) {
    %c0_i32 = arith.constant 0 : i32
    %c0_i32_0 = arith.constant 0 : i32
    %c0_i32_1 = arith.constant 0 : i32
    return %c0_i32, %c0_i32_0 : i32, i32
  }
  func.func @transform_7(%arg0: i32) -> (i32, i32) {
    %c0_i32 = arith.constant 0 : i32
    %c0_i32_0 = arith.constant 0 : i32
    return %arg0, %c0_i32 : i32, i32
  }
}

</mosaic_0001>

<llo_original>
// kernel: forward.1
$region0: #{forward.1}
  #allocation0 [shape = 'u32[]', space=smem, size = 0x4, offset = 0x4, fixed_abs, tag = 'smem constant byte address 0x4 - core index']
  #allocation1 [shape = 'u32[144,128]{1,0:T(1,128)}', space=vmem, size = 0x12000, scoped, tag = 'internal scratch']
  %s0 = inlined_call_operand.vmem [shape: bf16[8,128], index: 0, kind: input, shape index: {}]
  %s1 = inlined_call_operand.vmem [shape: bf16[128,128], index: 1, kind: input, shape index: {}]
  %s2 = inlined_call_operand.vmem [shape: f32[1,128], index: 2, kind: input, shape index: {}]
  %s3 = inlined_call_operand.hbm [shape: bf16[2,128,128], index: 3, kind: input, shape index: {}]
  %s4 = inlined_call_operand.vmem [shape: f32[2,1,128], index: 4, kind: input, shape index: {}]
  %s5 = inlined_call_operand.hbm [shape: bf16[128,128], index: 5, kind: input, shape index: {}]
  %s6 = inlined_call_operand.vmem [shape: f32[1,128], index: 6, kind: input, shape index: {}]
  %s7 = inlined_call_operand.vmem [shape: f32[8,128], index: 7, kind: output, shape index: {}]
  %s8 = sld [smem:[#allocation0]]
  $region46: #{forward.1} parent=0
    _
  %s10 = ssub.s32 1, %s8
  %s11 = scalar_select 0, %s10, %s8
  $region1: #{forward.1} parent=0
    #allocation2 [shape = 'u8[65536]{0}', space=vmem, size = 0x10000, scoped, tag = 'input window, operand 3, single buffered']
    #allocation3 [shape = 's32[1]{0}', space=sflag, size = 0x4, scoped, tag = 'scoped memory for forward.1']
    #allocation4 [shape = 'u8[32768]{0}', space=vmem, size = 0x8000, scoped, tag = 'input window, operand 5, single buffered']
    #allocation5 [shape = 's32[1]{0}', space=sflag, size = 0x4, scoped, tag = 'scoped memory for forward.1']
    %12 = vsyncpa [#allocation3], 0
    %13 = vsyncpa [#allocation5], 0
    // Predicated region
    $region2: #{forward.1} parent=1 // pred_check
      _
    $region3: #{forward.1} parent=1 // pred_check_branch
      %15 = sbr.rel (0) target = $region5
    $region4: #{forward.1} parent=1 // pred_region
      _
    $region5: #{forward.1} parent=1 // pred_fallthru
      _
    // Predicated region
    $region6: #{forward.1} parent=1 // pred_check
      _
    $region7: #{forward.1} parent=1 // pred_check_branch
      %17 = sbr.rel (0) target = $region9
    $region8: #{forward.1} parent=1 // pred_region
      _
    $region9: #{forward.1} parent=1 // pred_fallthru
      _
    // Predicated region
    $region10: #{forward.1} parent=1 // pred_check
      _
    $region11: #{forward.1} parent=1 // pred_check_branch
      %19 = sbr.rel (0) target = $region13
    $region12: #{forward.1} parent=1 // pred_region
      _
    $region13: #{forward.1} parent=1 // pred_fallthru
      _
    // Predicated region
    $region14: #{forward.1} parent=1 // pred_check
      _
    $region15: #{forward.1} parent=1 // pred_check_branch
      %21 = sbr.rel (0) target = $region17
    $region16: #{forward.1} parent=1 // pred_region
      %s23 = ssub.s32 2048, 2048
      %24 = vsyncadd [#allocation3], %s23
      %s25 = sshll.u32 [#allocation2], 4
      %s26 = int_to_ptr.vmem [resolvable:$true] %s25
      %31 = dma.hbm_to_vmem [thread:$0]  %s3, 2048, %s26, [#allocation3], 64, 64, 4
    $region17: #{forward.1} parent=1 // pred_fallthru
      _
    // Predicated region
    $region18: #{forward.1} parent=1 // pred_check
      _
    $region19: #{forward.1} parent=1 // pred_check_branch
      %33 = sbr.rel (0) target = $region21
    $region20: #{forward.1} parent=1 // pred_region
      _
    $region21: #{forward.1} parent=1 // pred_fallthru
      _
    // Predicated region
    $region22: #{forward.1} parent=1 // pred_check
      _
    $region23: #{forward.1} parent=1 // pred_check_branch
      %35 = sbr.rel (0) target = $region25
    $region24: #{forward.1} parent=1 // pred_region
      %s37 = ssub.s32 1024, 1024
      %38 = vsyncadd [#allocation5], %s37
      %s39 = sshll.u32 [#allocation4], 4
      %s40 = int_to_ptr.vmem [resolvable:$true] %s39
      %45 = dma.hbm_to_vmem [thread:$0]  %s5, 1024, %s40, [#allocation5], 64, 64, 4
    $region25: #{forward.1} parent=1 // pred_fallthru
      _
    // Predicated region
    $region26: #{forward.1} parent=1 // pred_check
      _
    $region27: #{forward.1} parent=1 // pred_check_branch
      %47 = sbr.rel (0) target = $region29
    $region28: #{forward.1} parent=1 // pred_region
      _
    $region29: #{forward.1} parent=1 // pred_fallthru
      _
    // Predicated region
    $region30: #{forward.1} parent=1 // pred_check
      _
    $region31: #{forward.1} parent=1 // pred_check_branch
      %49 = sbr.rel (0) target = $region33
    $region32: #{forward.1} parent=1 // pred_region
      %50 = dma.done [#allocation3], 2048
    $region33: #{forward.1} parent=1 // pred_fallthru
      _
    // Predicated region
    $region34: #{forward.1} parent=1 // pred_check
      _
    $region35: #{forward.1} parent=1 // pred_check_branch
      %52 = sbr.rel (0) target = $region37
    $region36: #{forward.1} parent=1 // pred_region
      %53 = dma.done [#allocation5], 1024
    $region37: #{forward.1} parent=1 // pred_fallthru
      _
    %v55 = vld [vmem:[%s0] sm:$0xf]
    %v56 = vld [vmem:[%s1] sm:$0xf]
    %v57 = vld [vmem:[%s1 + $0x4] sm:$0xf]
    %v58 = vld [vmem:[%s1 + $0x8] sm:$0xf]
    %v59 = vld [vmem:[%s1 + $0xc] sm:$0xf]
    %v60 = vld [vmem:[%s1 + $0x10] sm:$0xf]
    %v61 = vld [vmem:[%s1 + $0x14] sm:$0xf]
    %v62 = vld [vmem:[%s1 + $0x18] sm:$0xf]
    %v63 = vld [vmem:[%s1 + $0x1c] sm:$0xf]
    %v64 = vld [vmem:[%s1 + $0x20] sm:$0xf]
    %v65 = vld [vmem:[%s1 + $0x24] sm:$0xf]
    %v66 = vld [vmem:[%s1 + $0x28] sm:$0xf]
    %v67 = vld [vmem:[%s1 + $0x2c] sm:$0xf]
    %v68 = vld [vmem:[%s1 + $0x30] sm:$0xf]
    %v69 = vld [vmem:[%s1 + $0x34] sm:$0xf]
    %v70 = vld [vmem:[%s1 + $0x38] sm:$0xf]
    %v71 = vld [vmem:[%s1 + $0x3c] sm:$0xf]
    %v72 = vld [vmem:[%s2] sm:$0x1]
    %v74 = vlaneseq
    %v75 = vshrl.u32 %v74, 7
    %v76 = vsub.s32 0, %v75
    %v77 = vrot.slane %v72, %v76
    %v95 = vunpack.c.l.b16 %v56
    %v96 = vunpack.c.l.b16 %v57
    %v97 = vunpack.c.l.b16 %v58
    %v98 = vunpack.c.l.b16 %v59
    %v99 = vunpack.c.l.b16 %v60
    %v100 = vunpack.c.l.b16 %v61
    %v101 = vunpack.c.l.b16 %v62
    %v102 = vunpack.c.l.b16 %v63
    %v103 = vunpack.c.l.b16 %v64
    %v104 = vunpack.c.l.b16 %v65
    %v105 = vunpack.c.l.b16 %v66
    %v106 = vunpack.c.l.b16 %v67
    %v107 = vunpack.c.l.b16 %v68
    %v108 = vunpack.c.l.b16 %v69
    %v109 = vunpack.c.l.b16 %v70
    %v110 = vunpack.c.l.b16 %v71
    %v111 = vpack.c.b16 %v96, %v95
    %v112 = vpack.c.b16 %v98, %v97
    %v113 = vpack.c.b16 %v100, %v99
    %v114 = vpack.c.b16 %v102, %v101
    %v115 = vpack.c.b16 %v104, %v103
    %v116 = vpack.c.b16 %v106, %v105
    %v117 = vpack.c.b16 %v108, %v107
    %v118 = vpack.c.b16 %v110, %v109
    %127 = vmatprep.subr.bf16.mxu0 0
    %128 = vmatpush1.bf16.msra.mxu0 %v118
    %129 = vmatprep.subr.bf16.mxu0 0
    %130 = vmatpush1.bf16.msra.mxu0 %v117
    %131 = vmatprep.subr.bf16.mxu0 0
    %132 = vmatpush1.bf16.msra.mxu0 %v116
    %133 = vmatprep.subr.bf16.mxu0 0
    %134 = vmatpush1.bf16.msra.mxu0 %v115
    %135 = vmatprep.subr.bf16.mxu0 0
    %136 = vmatpush1.bf16.msra.mxu0 %v114
    %137 = vmatprep.subr.bf16.mxu0 0
    %138 = vmatpush1.bf16.msra.mxu0 %v113
    %139 = vmatprep.subr.bf16.mxu0 0
    %140 = vmatpush1.bf16.msra.mxu0 %v112
    %141 = vmatprep.subr.bf16.mxu0 0
    %142 = vmatpush1.bf16.msra.mxu0 %v111
    %143 = vmatprep.subr.bf16.mxu0 0
    %144 = vmatpush2.bf16.msra.mxu0 0
    %145 = vmatprep.subr.bf16.mxu0 0
    %146 = vmatpush2.bf16.msra.mxu0 0
    %147 = vmatprep.subr.bf16.mxu0 0
    %148 = vmatpush2.bf16.msra.mxu0 0
    %149 = vmatprep.subr.bf16.mxu0 0
    %150 = vmatpush2.bf16.msra.mxu0 0
    %151 = vmatprep.subr.bf16.mxu0 0
    %152 = vmatpush2.bf16.msra.mxu0 0
    %153 = vmatprep.subr.bf16.mxu0 0
    %154 = vmatpush2.bf16.msra.mxu0 0
    %155 = vmatprep.subr.bf16.mxu0 0
    %156 = vmatpush2.bf16.msra.mxu0 0
    %157 = vmatprep.subr.bf16.mxu0 0
    %158 = vmatpush2.bf16.msra.mxu0 0
    %159 = vmatprep.mubr.bf16.mxu0 0
    %160 = vmatmul.mubr.bf16.gmra.mxu0 %v55
    %v161 = vpop.f32.mrf.mxu0
    %v162 = vadd.f32 %v77, %v161
    %v163 = vpop.f32.mrf.mxu0
    %v164 = vpop.f32.mrf.mxu0
    %v165 = vpop.f32.mrf.mxu0
    %166 = vdwg.mxu0
    %v167 = vmax.f32 %v162, 0.0
    %v168 = vpack.c.bf16 %v167, %v167
    %v169 = vld [vmem:[#allocation2] sm:$0xf]
    %v170 = vld [vmem:[#allocation2 + $0x4] sm:$0xf]
    %v171 = vld [vmem:[#allocation2 + $0x8] sm:$0xf]
    %v172 = vld [vmem:[#allocation2 + $0xc] sm:$0xf]
    %v173 = vld [vmem:[#allocation2 + $0x10] sm:$0xf]
    %v174 = vld [vmem:[#allocation2 + $0x14] sm:$0xf]
    %v175 = vld [vmem:[#allocation2 + $0x18] sm:$0xf]
    %v176 = vld [vmem:[#allocation2 + $0x1c] sm:$0xf]
    %v177 = vld [vmem:[#allocation2 + $0x20] sm:$0xf]
    %v178 = vld [vmem:[#allocation2 + $0x24] sm:$0xf]
    %v179 = vld [vmem:[#allocation2 + $0x28] sm:$0xf]
    %v180 = vld [vmem:[#allocation2 + $0x2c] sm:$0xf]
    %v181 = vld [vmem:[#allocation2 + $0x30] sm:$0xf]
    %v182 = vld [vmem:[#allocation2 + $0x34] sm:$0xf]
    %v183 = vld [vmem:[#allocation2 + $0x38] sm:$0xf]
    %v184 = vld [vmem:[#allocation2 + $0x3c] sm:$0xf]
    %v185 = vld [vmem:[%s4] sm:$0x1]
    %v187 = vlaneseq
    %v188 = vshrl.u32 %v187, 7
    %v189 = vsub.s32 0, %v188
    %v190 = vrot.slane %v185, %v189
    %v208 = vunpack.c.l.b16 %v169
    %v209 = vunpack.c.l.b16 %v170
    %v210 = vunpack.c.l.b16 %v171
    %v211 = vunpack.c.l.b16 %v172
    %v212 = vunpack.c.l.b16 %v173
    %v213 = vunpack.c.l.b16 %v174
    %v214 = vunpack.c.l.b16 %v175
    %v215 = vunpack.c.l.b16 %v176
    %v216 = vunpack.c.l.b16 %v177
    %v217 = vunpack.c.l.b16 %v178
    %v218 = vunpack.c.l.b16 %v179
    %v219 = vunpack.c.l.b16 %v180
    %v220 = vunpack.c.l.b16 %v181
    %v221 = vunpack.c.l.b16 %v182
    %v222 = vunpack.c.l.b16 %v183
    %v223 = vunpack.c.l.b16 %v184
    %v224 = vpack.c.b16 %v209, %v208
    %v225 = vpack.c.b16 %v211, %v210
    %v226 = vpack.c.b16 %v213, %v212
    %v227 = vpack.c.b16 %v215, %v214
    %v228 = vpack.c.b16 %v217, %v216
    %v229 = vpack.c.b16 %v219, %v218
    %v230 = vpack.c.b16 %v221, %v220
    %v231 = vpack.c.b16 %v223, %v222
    %240 = vmatprep.subr.bf16.mxu0 0
    %241 = vmatpush1.bf16.msra.mxu0 %v231
    %242 = vmatprep.subr.bf16.mxu0 0
    %243 = vmatpush1.bf16.msra.mxu0 %v230
    %244 = vmatprep.subr.bf16.mxu0 0
    %245 = vmatpush1.bf16.msra.mxu0 %v229
    %246 = vmatprep.subr.bf16.mxu0 0
    %247 = vmatpush1.bf16.msra.mxu0 %v228
    %248 = vmatprep.subr.bf16.mxu0 0
    %249 = vmatpush1.bf16.msra.mxu0 %v227
    %250 = vmatprep.subr.bf16.mxu0 0
    %251 = vmatpush1.bf16.msra.mxu0 %v226
    %252 = vmatprep.subr.bf16.mxu0 0
    %253 = vmatpush1.bf16.msra.mxu0 %v225
    %254 = vmatprep.subr.bf16.mxu0 0
    %255 = vmatpush1.bf16.msra.mxu0 %v224
    %256 = vmatprep.subr.bf16.mxu0 0
    %257 = vmatpush2.bf16.msra.mxu0 0
    %258 = vmatprep.subr.bf16.mxu0 0
    %259 = vmatpush2.bf16.msra.mxu0 0
    %260 = vmatprep.subr.bf16.mxu0 0
    %261 = vmatpush2.bf16.msra.mxu0 0
    %262 = vmatprep.subr.bf16.mxu0 0
    %263 = vmatpush2.bf16.msra.mxu0 0
    %264 = vmatprep.subr.bf16.mxu0 0
    %265 = vmatpush2.bf16.msra.mxu0 0
    %266 = vmatprep.subr.bf16.mxu0 0
    %267 = vmatpush2.bf16.msra.mxu0 0
    %268 = vmatprep.subr.bf16.mxu0 0
    %269 = vmatpush2.bf16.msra.mxu0 0
    %270 = vmatprep.subr.bf16.mxu0 0
    %271 = vmatpush2.bf16.msra.mxu0 0
    %272 = vmatprep.mubr.bf16.mxu0 0
    %273 = vmatmul.mubr.bf16.gmra.mxu0 %v168
    %v274 = vpop.f32.mrf.mxu0
    %v275 = vadd.f32 %v190, %v274
    %v276 = vpop.f32.mrf.mxu0
    %v277 = vpop.f32.mrf.mxu0
    %v278 = vpop.f32.mrf.mxu0
    %279 = vdwg.mxu0
    %v280 = vmax.f32 %v275, 0.0
    %v281 = vpack.c.bf16 %v280, %v280
    %s282 = scalar_lea.vmem [#allocation2], 64
    %v283 = vld [vmem:[%s282] sm:$0xf]
    %v284 = vld [vmem:[%s282 + $0x4] sm:$0xf]
    %v285 = vld [vmem:[%s282 + $0x8] sm:$0xf]
    %v286 = vld [vmem:[%s282 + $0xc] sm:$0xf]
    %v287 = vld [vmem:[%s282 + $0x10] sm:$0xf]
    %v288 = vld [vmem:[%s282 + $0x14] sm:$0xf]
    %v289 = vld [vmem:[%s282 + $0x18] sm:$0xf]
    %v290 = vld [vmem:[%s282 + $0x1c] sm:$0xf]
    %v291 = vld [vmem:[%s282 + $0x20] sm:$0xf]
    %v292 = vld [vmem:[%s282 + $0x24] sm:$0xf]
    %v293 = vld [vmem:[%s282 + $0x28] sm:$0xf]
    %v294 = vld [vmem:[%s282 + $0x2c] sm:$0xf]
    %v295 = vld [vmem:[%s282 + $0x30] sm:$0xf]
    %v296 = vld [vmem:[%s282 + $0x34] sm:$0xf]
    %v297 = vld [vmem:[%s282 + $0x38] sm:$0xf]
    %v298 = vld [vmem:[%s282 + $0x3c] sm:$0xf]
    %s299 = scalar_lea.vmem %s4, 1
    %v300 = vld [vmem:[%s299] sm:$0x1]
    %v302 = vlaneseq
    %v303 = vshrl.u32 %v302, 7
    %v304 = vsub.s32 0, %v303
    %v305 = vrot.slane %v300, %v304
    %v323 = vunpack.c.l.b16 %v283
    %v324 = vunpack.c.l.b16 %v284
    %v325 = vunpack.c.l.b16 %v285
    %v326 = vunpack.c.l.b16 %v286
    %v327 = vunpack.c.l.b16 %v287
    %v328 = vunpack.c.l.b16 %v288
    %v329 = vunpack.c.l.b16 %v289
    %v330 = vunpack.c.l.b16 %v290
    %v331 = vunpack.c.l.b16 %v291
    %v332 = vunpack.c.l.b16 %v292
    %v333 = vunpack.c.l.b16 %v293
    %v334 = vunpack.c.l.b16 %v294
    %v335 = vunpack.c.l.b16 %v295
    %v336 = vunpack.c.l.b16 %v296
    %v337 = vunpack.c.l.b16 %v297
    %v338 = vunpack.c.l.b16 %v298
    %v339 = vpack.c.b16 %v324, %v323
    %v340 = vpack.c.b16 %v326, %v325
    %v341 = vpack.c.b16 %v328, %v327
    %v342 = vpack.c.b16 %v330, %v329
    %v343 = vpack.c.b16 %v332, %v331
    %v344 = vpack.c.b16 %v334, %v333
    %v345 = vpack.c.b16 %v336, %v335
    %v346 = vpack.c.b16 %v338, %v337
    %355 = vmatprep.subr.bf16.mxu0 0
    %356 = vmatpush1.bf16.msra.mxu0 %v346
    %357 = vmatprep.subr.bf16.mxu0 0
    %358 = vmatpush1.bf16.msra.mxu0 %v345
    %359 = vmatprep.subr.bf16.mxu0 0
    %360 = vmatpush1.bf16.msra.mxu0 %v344
    %361 = vmatprep.subr.bf16.mxu0 0
    %362 = vmatpush1.bf16.msra.mxu0 %v343
    %363 = vmatprep.subr.bf16.mxu0 0
    %364 = vmatpush1.bf16.msra.mxu0 %v342
    %365 = vmatprep.subr.bf16.mxu0 0
    %366 = vmatpush1.bf16.msra.mxu0 %v341
    %367 = vmatprep.subr.bf16.mxu0 0
    %368 = vmatpush1.bf16.msra.mxu0 %v340
    %369 = vmatprep.subr.bf16.mxu0 0
    %370 = vmatpush1.bf16.msra.mxu0 %v339
    %371 = vmatprep.subr.bf16.mxu0 0
    %372 = vmatpush2.bf16.msra.mxu0 0
    %373 = vmatprep.subr.bf16.mxu0 0
    %374 = vmatpush2.bf16.msra.mxu0 0
    %375 = vmatprep.subr.bf16.mxu0 0
    %376 = vmatpush2.bf16.msra.mxu0 0
    %377 = vmatprep.subr.bf16.mxu0 0
    %378 = vmatpush2.bf16.msra.mxu0 0
    %379 = vmatprep.subr.bf16.mxu0 0
    %380 = vmatpush2.bf16.msra.mxu0 0
    %381 = vmatprep.subr.bf16.mxu0 0
    %382 = vmatpush2.bf16.msra.mxu0 0
    %383 = vmatprep.subr.bf16.mxu0 0
    %384 = vmatpush2.bf16.msra.mxu0 0
    %385 = vmatprep.subr.bf16.mxu0 0
    %386 = vmatpush2.bf16.msra.mxu0 0
    %387 = vmatprep.mubr.bf16.mxu0 0
    %388 = vmatmul.mubr.bf16.gmra.mxu0 %v281
    %v389 = vpop.f32.mrf.mxu0
    %v390 = vadd.f32 %v305, %v389
    %v391 = vpop.f32.mrf.mxu0
    %v392 = vpop.f32.mrf.mxu0
    %v393 = vpop.f32.mrf.mxu0
    %394 = vdwg.mxu0
    %v395 = vmax.f32 %v390, 0.0
    %v396 = vpack.c.bf16 %v395, %v395
    %v397 = vld [vmem:[#allocation4] sm:$0xf]
    %v398 = vld [vmem:[#allocation4 + $0x4] sm:$0xf]
    %v399 = vld [vmem:[#allocation4 + $0x8] sm:$0xf]
    %v400 = vld [vmem:[#allocation4 + $0xc] sm:$0xf]
    %v401 = vld [vmem:[#allocation4 + $0x10] sm:$0xf]
    %v402 = vld [vmem:[#allocation4 + $0x14] sm:$0xf]
    %v403 = vld [vmem:[#allocation4 + $0x18] sm:$0xf]
    %v404 = vld [vmem:[#allocation4 + $0x1c] sm:$0xf]
    %v405 = vld [vmem:[#allocation4 + $0x20] sm:$0xf]
    %v406 = vld [vmem:[#allocation4 + $0x24] sm:$0xf]
    %v407 = vld [vmem:[#allocation4 + $0x28] sm:$0xf]
    %v408 = vld [vmem:[#allocation4 + $0x2c] sm:$0xf]
    %v409 = vld [vmem:[#allocation4 + $0x30] sm:$0xf]
    %v410 = vld [vmem:[#allocation4 + $0x34] sm:$0xf]
    %v411 = vld [vmem:[#allocation4 + $0x38] sm:$0xf]
    %v412 = vld [vmem:[#allocation4 + $0x3c] sm:$0xf]
    %v413 = vld [vmem:[%s6] sm:$0x1]
    %v415 = vlaneseq
    %v416 = vshrl.u32 %v415, 7
    %v417 = vsub.s32 0, %v416
    %v418 = vrot.slane %v413, %v417
    %v436 = vunpack.c.l.b16 %v397
    %v437 = vunpack.c.l.b16 %v398
    %v438 = vunpack.c.l.b16 %v399
    %v439 = vunpack.c.l.b16 %v400
    %v440 = vunpack.c.l.b16 %v401
    %v441 = vunpack.c.l.b16 %v402
    %v442 = vunpack.c.l.b16 %v403
    %v443 = vunpack.c.l.b16 %v404
    %v444 = vunpack.c.l.b16 %v405
    %v445 = vunpack.c.l.b16 %v406
    %v446 = vunpack.c.l.b16 %v407
    %v447 = vunpack.c.l.b16 %v408
    %v448 = vunpack.c.l.b16 %v409
    %v449 = vunpack.c.l.b16 %v410
    %v450 = vunpack.c.l.b16 %v411
    %v451 = vunpack.c.l.b16 %v412
    %v452 = vpack.c.b16 %v437, %v436
    %v453 = vpack.c.b16 %v439, %v438
    %v454 = vpack.c.b16 %v441, %v440
    %v455 = vpack.c.b16 %v443, %v442
    %v456 = vpack.c.b16 %v445, %v444
    %v457 = vpack.c.b16 %v447, %v446
    %v458 = vpack.c.b16 %v449, %v448
    %v459 = vpack.c.b16 %v451, %v450
    %468 = vmatprep.subr.bf16.mxu0 0
    %469 = vmatpush1.bf16.msra.mxu0 %v459
    %470 = vmatprep.subr.bf16.mxu0 0
    %471 = vmatpush1.bf16.msra.mxu0 %v458
    %472 = vmatprep.subr.bf16.mxu0 0
    %473 = vmatpush1.bf16.msra.mxu0 %v457
    %474 = vmatprep.subr.bf16.mxu0 0
    %475 = vmatpush1.bf16.msra.mxu0 %v456
    %476 = vmatprep.subr.bf16.mxu0 0
    %477 = vmatpush1.bf16.msra.mxu0 %v455
    %478 = vmatprep.subr.bf16.mxu0 0
    %479 = vmatpush1.bf16.msra.mxu0 %v454
    %480 = vmatprep.subr.bf16.mxu0 0
    %481 = vmatpush1.bf16.msra.mxu0 %v453
    %482 = vmatprep.subr.bf16.mxu0 0
    %483 = vmatpush1.bf16.msra.mxu0 %v452
    %484 = vmatprep.subr.bf16.mxu0 0
    %485 = vmatpush2.bf16.msra.mxu0 0
    %486 = vmatprep.subr.bf16.mxu0 0
    %487 = vmatpush2.bf16.msra.mxu0 0
    %488 = vmatprep.subr.bf16.mxu0 0
    %489 = vmatpush2.bf16.msra.mxu0 0
    %490 = vmatprep.subr.bf16.mxu0 0
    %491 = vmatpush2.bf16.msra.mxu0 0
    %492 = vmatprep.subr.bf16.mxu0 0
    %493 = vmatpush2.bf16.msra.mxu0 0
    %494 = vmatprep.subr.bf16.mxu0 0
    %495 = vmatpush2.bf16.msra.mxu0 0
    %496 = vmatprep.subr.bf16.mxu0 0
    %497 = vmatpush2.bf16.msra.mxu0 0
    %498 = vmatprep.subr.bf16.mxu0 0
    %499 = vmatpush2.bf16.msra.mxu0 0
    %500 = vmatprep.mubr.bf16.mxu0 0
    %501 = vmatmul.mubr.bf16.gmra.mxu0 %v396
    %v502 = vpop.f32.mrf.mxu0
    %v503 = vadd.f32 %v418, %v502
    %v504 = vpop.f32.mrf.mxu0
    %v505 = vpop.f32.mrf.mxu0
    %v506 = vpop.f32.mrf.mxu0
    %507 = vdwg.mxu0
    %508 = vst [vmem:[%s7] sm:$0xff] %v503
    // Predicated region
    $region38: #{forward.1} parent=1 // pred_check
      _
    $region39: #{forward.1} parent=1 // pred_check_branch
      %510 = sbr.rel (0) target = $region41
    $region40: #{forward.1} parent=1 // pred_region
      _
    $region41: #{forward.1} parent=1 // pred_fallthru
      _
    // Predicated region
    $region42: #{forward.1} parent=1 // pred_check
      _
    $region43: #{forward.1} parent=1 // pred_check_branch
      %512 = sbr.rel (0) target = $region45
    $region44: #{forward.1} parent=1 // pred_region
      _
    $region45: #{forward.1} parent=1 // pred_fallthru
      _
    %513 = vsyncpa [#allocation3], 1
    %514 = vsyncpa [#allocation5], 1

</llo_original>
